<compile_context>
chip_gen: v5e
topology: v5e:2x2
jax: 0.10.0
libtpu: 0.0.40
codegen_flags: <defaults>
</compile_context>

<pallas_src>
import functools
import numpy as np
import jax
import jax.numpy as jnp
from jax.experimental import pallas as pl
from jax.experimental.pallas import tpu as pltpu


def _round_up(x, m):
    return ((x + m - 1) // m) * m


def _vmem_limit(needed_bytes):
    # Generous headroom, floored at 32 MiB, capped at 64 MiB (safe on every
    # generation; raise toward 128 MiB on v5e/v6e if a real config needs it).
    return int(min(64 << 20, max(32 << 20, 2 * int(needed_bytes) + (4 << 20))))


# ----------------------------------------------------------------------------
# Dense (matmul + bias) kernels
# ----------------------------------------------------------------------------
def _dense_kernel(x_ref, w_ref, b_ref, o_ref):
    x = x_ref[...].astype(w_ref.dtype)          # bf16 MXU inputs, f32 accumulate
    o_ref[...] = (jnp.dot(x, w_ref[...], preferred_element_type=jnp.float32)
                  + b_ref[...])


def dense_rows(x, w, b, tm=512):
    """(M,K) @ (K,N) + (1,N) -> (M,N); grid over M rows, weight/bias resident
    (streamed once).  Use when the weight is the small operand (layer-0 proj)."""
    M, K = x.shape
    N = w.shape[1]
    tm = min(tm, _round_up(M, 8))
    Mp = _round_up(M, tm)
    if Mp != M:                                  # callers pre-size M to avoid this
        x = jnp.pad(x, ((0, Mp - M), (0, 0)))
    needed = 2 * tm * K * 4 + K * N * w.dtype.itemsize + N * 4 + 2 * tm * N * 4
    out = pl.pallas_call(
        _dense_kernel,
        out_shape=jax.ShapeDtypeStruct((Mp, N), jnp.float32),
        grid=(Mp // tm,),
        in_specs=[
            pl.BlockSpec((tm, K), lambda i: (i, 0)),
            pl.BlockSpec((K, N), lambda i: (0, 0)),
            pl.BlockSpec((1, N), lambda i: (0, 0)),
        ],
        out_specs=pl.BlockSpec((tm, N), lambda i: (i, 0)),
        compiler_params=pltpu.CompilerParams(
            dimension_semantics=("parallel",),
            vmem_limit_bytes=_vmem_limit(needed)),
    )(x, w, b)
    return out[:M] if Mp != M else out


def dense_cols(x, w, b, tn=512):
    """(M,K) @ (K,N) + (1,N) -> (M,N); activation resident, grid over N columns
    so the (large) weight is streamed from HBM exactly once (vocab projection)."""
    M, K = x.shape
    N = w.shape[1]
    tn = min(tn, _round_up(N, 128))
    Np = _round_up(N, tn)
    if Np != N:                                  # weights are pre-padded in prepare_params
        w = jnp.pad(w, ((0, 0), (0, Np - N)))
        b = jnp.pad(b, ((0, 0), (0, Np - N)))
    needed = M * K * 4 + 2 * K * tn * w.dtype.itemsize + 2 * tn * 4 + 2 * M * tn * 4
    out = pl.pallas_call(
        _dense_kernel,
        out_shape=jax.ShapeDtypeStruct((M, Np), jnp.float32),
        grid=(Np // tn,),
        in_specs=[
            pl.BlockSpec((M, K), lambda j: (0, 0)),
            pl.BlockSpec((K, tn), lambda j: (0, j)),
            pl.BlockSpec((1, tn), lambda j: (0, j)),
        ],
        out_specs=pl.BlockSpec((M, tn), lambda j: (0, j)),
        compiler_params=pltpu.CompilerParams(
            dimension_semantics=("parallel",),
            vmem_limit_bytes=_vmem_limit(needed)),
    )(x, w, b)
    return out[:, :N] if Np != N else out


# ----------------------------------------------------------------------------
# LSTM recurrence kernel: grid = (batch_blocks [parallel], time [arbitrary])
# ----------------------------------------------------------------------------
def _lstm_kernel(xg_ref, whh0_ref, wih_rest_ref, whh_rest_ref, b_rest_ref,
                 out_ref, h_scr, c_scr, *, num_layers, hidden):
    H = hidden
    t = pl.program_id(1)

    @pl.when(t == 0)
    def _():
        h_scr[...] = jnp.zeros_like(h_scr)
        c_scr[...] = jnp.zeros_like(c_scr)

    wd = whh0_ref.dtype        # bf16 weights; f32 accumulate + f32 gate math

    def cell(gates, c_prev):
        i_g = jax.nn.sigmoid(gates[:, 0 * H:1 * H])
        f_g = jax.nn.sigmoid(gates[:, 1 * H:2 * H])
        g_g = jnp.tanh(gates[:, 2 * H:3 * H])
        o_g = jax.nn.sigmoid(gates[:, 3 * H:4 * H])
        c_new = f_g * c_prev + i_g * g_g
        h_new = o_g * jnp.tanh(c_new)
        return h_new, c_new

    # All recurrent matmuls depend only on h_{t-1}: issue them up front so the
    # upper layers' W_hh products overlap layer 0 instead of sitting on the
    # serial dependency chain (latency-bound: B_pad rows << MXU rows).
    hh = [jnp.dot(h_scr[0].astype(wd), whh0_ref[...],
                  preferred_element_type=jnp.float32)]
    for l in range(1, num_layers):
        hh.append(jnp.dot(h_scr[l].astype(wd), whh_rest_ref[l - 1],
                          preferred_element_type=jnp.float32))

    # Layer 0: x @ W_ih + b was hoisted out of the recurrence (xg_ref).
    h_new, c_new = cell(xg_ref[0] + hh[0], c_scr[0])
    h_scr[0] = h_new
    c_scr[0] = c_new
    inp = h_new
    # Layers >= 1: separate W_ih / W_hh (no [x,h] concat round trip via VMEM).
    for l in range(1, num_layers):
        gates = (jnp.dot(inp.astype(wd), wih_rest_ref[l - 1],
                         preferred_element_type=jnp.float32)
                 + b_rest_ref[l - 1] + hh[l])
        h_new, c_new = cell(gates, c_scr[l])
        h_scr[l] = h_new
        c_scr[l] = c_new
        inp = h_new
    out_ref[0] = inp


def lstm_forward(xg, whh0_t, wih_rest, whh_rest, b_rest,
                 num_layers, hidden_pad, batch_block):
    """xg: (T, B_pad, 4*H_pad) precomputed layer-0 gate pre-activations
    -> (T, B_pad, H_pad) top-layer hidden states."""
    T, B_pad, _ = xg.shape
    H = hidden_pad
    bb = batch_block
    assert B_pad % bb == 0
    n_rest = wih_rest.shape[0]
    kernel = functools.partial(_lstm_kernel, num_layers=num_layers, hidden=H)

    w_bytes = ((whh0_t.size + wih_rest.size + whh_rest.size)
               * whh0_t.dtype.itemsize + b_rest.size * 4)
    blk_bytes = bb * (4 * H + H) * 4                    # one xg + one out block (f32)
    scratch_bytes = 2 * num_layers * bb * H * 4
    needed = 2 * w_bytes + 2 * blk_bytes + scratch_bytes

    return pl.pallas_call(
        kernel,
        out_shape=jax.ShapeDtypeStruct((T, B_pad, H), jnp.float32),
        grid=(B_pad // bb, T),
        in_specs=[
            pl.BlockSpec((1, bb, 4 * H), lambda b, t: (t, b, 0)),      # streamed per t
            pl.BlockSpec((H, 4 * H), lambda b, t: (0, 0)),             # resident
            pl.BlockSpec((n_rest, H, 4 * H), lambda b, t: (0, 0, 0)),  # resident
            pl.BlockSpec((n_rest, H, 4 * H), lambda b, t: (0, 0, 0)),  # resident
            pl.BlockSpec((n_rest, 1, 4 * H), lambda b, t: (0, 0, 0)),  # resident
        ],
        out_specs=pl.BlockSpec((1, bb, H), lambda b, t: (t, b, 0)),
        scratch_shapes=[
            pltpu.VMEM((num_layers, bb, H), jnp.float32),   # h state (persists over grid)
            pltpu.VMEM((num_layers, bb, H), jnp.float32),   # c state
        ],
        compiler_params=pltpu.CompilerParams(
            dimension_semantics=("parallel", "arbitrary"),
            vmem_limit_bytes=_vmem_limit(needed)),
    )(xg, whh0_t, wih_rest, whh_rest, b_rest)


# ----------------------------------------------------------------------------
# Parameter preparation (PyTorch layout -> padded, pre-transposed kernel layout)
# ----------------------------------------------------------------------------
def prepare_params(embed_w, w_ih, w_hh, b_ih, b_hh, lin_w, lin_b,
                   embed_size, hidden_size, vocab_size, num_layers,
                   weight_dtype=jnp.bfloat16, lane=128):
    H = hidden_size
    H_pad = _round_up(H, lane)
    V_pad = _round_up(vocab_size, lane)

    def pad_gates_cols(w_t):
        # (in_dim, 4H) -> (in_dim, 4*H_pad); each [i|f|g|o] block padded to H_pad lanes.
        in_dim = w_t.shape[0]
        out = np.zeros((in_dim, 4, H_pad), np.float32)
        out[:, :, :H] = np.asarray(w_t, np.float32).reshape(in_dim, 4, H)
        return out.reshape(in_dim, 4 * H_pad)

    # Layer 0: input projection weight (hoisted out of the recurrence) + recurrent weight.
    wih0_t = pad_gates_cols(np.asarray(w_ih[0]).T)                              # (E, 4*H_pad)
    b0 = pad_gates_cols((np.asarray(b_ih[0]) + np.asarray(b_hh[0]))[None, :])   # (1, 4*H_pad)
    whh0_t = np.zeros((H_pad, 4 * H_pad), np.float32)
    whh0_t[:H] = pad_gates_cols(np.asarray(w_hh[0]).T)

    # Layers >= 1: W_ih and W_hh kept separate (shorter dependency chain).
    # Tiny dummy slab when num_layers == 1 (keeps kernel signature static).
    n_rest = max(num_layers - 1, 1)
    wih_rest = np.zeros((n_rest, H_pad, 4 * H_pad), np.float32)
    whh_rest = np.zeros((n_rest, H_pad, 4 * H_pad), np.float32)
    b_rest = np.zeros((n_rest, 1, 4 * H_pad), np.float32)
    for l in range(1, num_layers):
        wih_rest[l - 1, :H] = pad_gates_cols(np.asarray(w_ih[l]).T)
        whh_rest[l - 1, :H] = pad_gates_cols(np.asarray(w_hh[l]).T)
        b_rest[l - 1, 0] = pad_gates_cols(
            (np.asarray(b_ih[l]) + np.asarray(b_hh[l]))[None, :])[0]

    lin_w_t = np.zeros((H_pad, V_pad), np.float32)
    lin_w_t[:H, :vocab_size] = np.asarray(lin_w, np.float32).T
    lin_b_arr = np.zeros((1, V_pad), np.float32)
    lin_b_arr[0, :vocab_size] = np.asarray(lin_b, np.float32)

    wd = weight_dtype
    return dict(
        embed_w=jnp.asarray(embed_w, jnp.float32),
        wih0_t=jnp.asarray(wih0_t, wd), b0=jnp.asarray(b0, jnp.float32),
        whh0_t=jnp.asarray(whh0_t, wd),
        wih_rest=jnp.asarray(wih_rest, wd), whh_rest=jnp.asarray(whh_rest, wd),
        b_rest=jnp.asarray(b_rest, jnp.float32),
        lin_w_t=jnp.asarray(lin_w_t, wd), lin_b=jnp.asarray(lin_b_arr, jnp.float32),
        num_layers=num_layers, hidden_size=H, hidden_pad=H_pad,
        vocab_size=vocab_size)


# ----------------------------------------------------------------------------
# Forward pass (reproduces DecoderRNN.forward)
# ----------------------------------------------------------------------------
def decoder_rnn_forward(params, features, captions, lengths):
    """features: (B, E) f32; captions: (B, T) i32; lengths: python list sorted
    descending, each <= T+1.  Returns (sum(lengths), vocab_size) f32 logits
    (linear over packed LSTM hiddens, pack_padded_sequence order)."""
    B, Tcap = captions.shape
    Tseq = Tcap + 1
    # Pad to a multiple of 16 when B > 8 so the batch can split in halves across
    # the two v7x TensorCores (legal: LSTM state is independent per batch row).
    b_pad = _round_up(B, 8) if B <= 8 else _round_up(B, 16)
    H_pad = params["hidden_pad"]
    L = params["num_layers"]
    V = params["vocab_size"]

    # Build the (Tseq, B_pad, E) input directly at padded batch: only the tiny
    # (B, .) inputs are padded, never the embedded activation slab.
    if b_pad != B:
        captions = jnp.pad(captions, ((0, b_pad - B), (0, 0)))
        features = jnp.pad(features, ((0, b_pad - B), (0, 0)))
    emb_t = jnp.take(params["embed_w"], captions.T, axis=0)       # (Tcap, B_pad, E)
    seq = jnp.concatenate([features[None, :, :], emb_t], axis=0)  # (Tseq, B_pad, E)

    # Hoisted layer-0 input projection + bias: one lane-dense tiled matmul with
    # the weight resident (streamed once), rows tiled up to 512.
    E = seq.shape[-1]
    xg = dense_rows(seq.reshape(Tseq * b_pad, E), params["wih0_t"], params["b0"])
    xg = xg.reshape(Tseq, b_pad, 4 * H_pad)

    # Sequential recurrence: time streamed as an "arbitrary" grid axis, batch
    # blocks "parallel".
    bb = b_pad if b_pad <= 8 else b_pad // 2
    hiddens = lstm_forward(xg, params["whh0_t"], params["wih_rest"],
                           params["whh_rest"], params["b_rest"],
                           L, H_pad, bb)                           # (Tseq, B_pad, H_pad)

    # Packed-sequence gather on the *small* (P, H_pad) hiddens, then the vocab
    # linear only over valid rows; the (H_pad, V_pad) weight streams once.
    lengths_arr = np.asarray(lengths)
    t_idx, b_idx = np.nonzero(
        np.arange(int(lengths_arr.max()))[:, None] < lengths_arr[None, :])
    flat = jnp.asarray(t_idx * b_pad + b_idx, dtype=jnp.int32)
    P = int(flat.shape[0])
    packed = jnp.take(hiddens.reshape(Tseq * b_pad, H_pad), flat, axis=0)
    P_pad = _round_up(P, 8)
    if P_pad != P:
        packed = jnp.pad(packed, ((0, P_pad - P), (0, 0)))
    logits = dense_cols(packed, params["lin_w_t"], params["lin_b"])  # (P_pad, V_pad)
    return logits[:P, :V]


# ----------------------------------------------------------------------------
# Pure-JAX reference (unpadded, PyTorch-shaped weights).  Matmuls model the
# kernel's MXU precision (bf16 inputs, f32 accumulation); everything else f32.
# ----------------------------------------------------------------------------
def _reference(embed_w, w_ih, w_hh, b_ih, b_hh, lin_w, lin_b,
               features, captions, lengths, hidden_size, num_layers):
    def mm(a, w):
        return jnp.dot(a.astype(jnp.bfloat16).astype(jnp.float32),
                       w.astype(jnp.bfloat16).astype(jnp.float32),
                       preferred_element_type=jnp.float32)

    B, Tcap = captions.shape
    H = hidden_size
    emb = jnp.take(embed_w, captions, axis=0)                      # (B, Tcap, E)
    seq = jnp.concatenate([features[:, None, :], emb], axis=1)     # (B, Tcap+1, E)
    x = jnp.transpose(seq, (1, 0, 2))                              # (T, B, E)
    h = jnp.zeros((num_layers, B, H), jnp.float32)
    c = jnp.zeros((num_layers, B, H), jnp.float32)
    outs = []
    for t in range(x.shape[0]):
        inp = x[t]
        for l in range(num_layers):
            gates = (mm(inp, w_ih[l].T) + mm(h[l], w_hh[l].T)
                     + b_ih[l] + b_hh[l])
            i_g = jax.nn.sigmoid(gates[:, 0 * H:1 * H])
            f_g = jax.nn.sigmoid(gates[:, 1 * H:2 * H])
            g_g = jnp.tanh(gates[:, 2 * H:3 * H])
            o_g = jax.nn.sigmoid(gates[:, 3 * H:4 * H])
            c_n = f_g * c[l] + i_g * g_g
            h_n = o_g * jnp.tanh(c_n)
            h = h.at[l].set(h_n)
            c = c.at[l].set(c_n)
            inp = h_n
        outs.append(inp)
    hiddens = jnp.stack(outs)                                      # (T, B, H)
    lengths_arr = np.asarray(lengths)
    t_idx, b_idx = np.nonzero(
        np.arange(int(lengths_arr.max()))[:, None] < lengths_arr[None, :])
    packed = hiddens[jnp.asarray(t_idx), jnp.asarray(b_idx)]
    return mm(packed, lin_w.T) + lin_b


# ----------------------------------------------------------------------------
if __name__ == "__main__":
    embed_size, hidden_size, vocab_size, num_layers = 32, 32, 64, 2
    B, Tcap = 4, 8
    lengths = [9, 7, 5, 3]            # sorted descending, each <= Tcap + 1

    E, H, V, L = embed_size, hidden_size, vocab_size, num_layers
    key = jax.random.PRNGKey(0)
    ks = iter(jax.random.split(key, 32))
    s = 1.0 / np.sqrt(H)

    def u(k, shape):
        return jax.random.uniform(k, shape, jnp.float32, -s, s)

    def q(a):  # make weights exactly bf16-representable so both paths round identically
        return jnp.asarray(a, jnp.float32).astype(jnp.bfloat16).astype(jnp.float32)

    # PyTorch-shaped parameters.
    embed_w = jax.random.normal(next(ks), (V, E), jnp.float32) * 0.1
    w_ih, w_hh, b_ih, b_hh = [], [], [], []
    for l in range(L):
        in_dim = E if l == 0 else H
        w_ih.append(q(u(next(ks), (4 * H, in_dim))))
        w_hh.append(q(u(next(ks), (4 * H, H))))
        b_ih.append(u(next(ks), (4 * H,)))
        b_hh.append(u(next(ks), (4 * H,)))
    lin_w = q(u(next(ks), (V, H)))
    lin_b = u(next(ks), (V,))

    features = jax.random.normal(next(ks), (B, E), jnp.float32)
    captions = jax.random.randint(next(ks), (B, Tcap), 0, V, jnp.int32)

    params = prepare_params(embed_w, w_ih, w_hh, b_ih, b_hh, lin_w, lin_b,
                            E, H, V, L, weight_dtype=jnp.bfloat16)

    out = decoder_rnn_forward(params, features, captions, lengths)
    out = jax.block_until_ready(out)
    assert out.shape == (sum(lengths), V), out.shape

    ref = _reference(embed_w, w_ih, w_hh, b_ih, b_hh, lin_w, lin_b,
                     features, captions, lengths, H, L)
    np.testing.assert_allclose(np.asarray(out), np.asarray(ref),
                               atol=2e-3, rtol=2e-3)

    print("KERNEL_OK")
</pallas_src>

<mosaic_0001>
module attributes {stable_mosaic.version = 11 : i64} {
  func.func @_dense_kernel(%arg0: i32, %arg1: memref<72x32xf32, #tpu.memory_space<vmem>>, %arg2: memref<32x512xbf16, #tpu.memory_space<vmem>>, %arg3: memref<1x512xf32, #tpu.memory_space<vmem>>, %arg4: memref<72x512xf32, #tpu.memory_space<vmem>>) attributes {dimension_semantics = [#tpu.dimension_semantics<parallel>], iteration_bounds = array<i64: 1>, scalar_prefetch = 0 : i64, scratch_operands = 0 : i64, tpu.core_type = #tpu.core_type<tc>, window_params = [{transform_indices = @transform_0, window_bounds = array<i64: 72, 32>}, {pipeline_mode = #tpu.pipeline_mode<synchronous>, transform_indices = @transform_1, window_bounds = array<i64: 32, 512>}, {pipeline_mode = #tpu.pipeline_mode<synchronous>, transform_indices = @transform_2, window_bounds = array<i64: 1, 512>}, {transform_indices = @transform_3, window_bounds = array<i64: 72, 512>}]} {
    %c0 = arith.constant 0 : index
    %c0_0 = arith.constant 0 : index
    %0 = vector.load %arg1[%c0, %c0_0] : memref<72x32xf32, #tpu.memory_space<vmem>>, vector<72x32xf32>
    %1 = arith.truncf %0 : vector<72x32xf32> to vector<72x32xbf16>
    %c0_1 = arith.constant 0 : index
    %c0_2 = arith.constant 0 : index
    %2 = vector.load %arg2[%c0_1, %c0_2] : memref<32x512xbf16, #tpu.memory_space<vmem>>, vector<32x512xbf16>
    %cst = arith.constant dense<0.000000e+00> : vector<72x512xf32>
    %3 = tpu.matmul %1, %2, %cst {dimension_numbers = #tpu.dot_dimension_numbers<[1], [0], [0], [1], [0, 0, 1, 1], [], []>} : vector<72x32xbf16>, vector<32x512xbf16>, vector<72x512xf32> -> vector<72x512xf32>
    %c0_3 = arith.constant 0 : index
    %c0_4 = arith.constant 0 : index
    %4 = vector.load %arg3[%c0_3, %c0_4] : memref<1x512xf32, #tpu.memory_space<vmem>>, vector<1x512xf32>
    %5 = vector.broadcast %4 : vector<1x512xf32> to vector<72x512xf32>
    %6 = arith.addf %3, %5 : vector<72x512xf32>
    %c0_5 = arith.constant 0 : index
    %c0_6 = arith.constant 0 : index
    %7 = vector.load %arg4[%c0_5, %c0_6] : memref<72x512xf32, #tpu.memory_space<vmem>>, vector<72x512xf32>
    tpu.vector_store %arg4[%c0_5, %c0_6], %6 {strides = array<i32>} : memref<72x512xf32, #tpu.memory_space<vmem>>, vector<72x512xf32>,
    return
  }
  func.func @transform_0(%arg0: i32) -> (i32, i32) {
    %c0_i32 = arith.constant 0 : i32
    %c0_i32_0 = arith.constant 0 : i32
    return %arg0, %c0_i32 : i32, i32
  }
  func.func @transform_1(%arg0: i32) -> (i32, i32) {
    %c0_i32 = arith.constant 0 : i32
    %c0_i32_0 = arith.constant 0 : i32
    %c0_i32_1 = arith.constant 0 : i32
    return %c0_i32, %c0_i32_0 : i32, i32
  }
  func.func @transform_2(%arg0: i32) -> (i32, i32) {
    %c0_i32 = arith.constant 0 : i32
    %c0_i32_0 = arith.constant 0 : i32
    %c0_i32_1 = arith.constant 0 : i32
    return %c0_i32, %c0_i32_0 : i32, i32
  }
  func.func @transform_3(%arg0: i32) -> (i32, i32) {
    %c0_i32 = arith.constant 0 : i32
    %c0_i32_0 = arith.constant 0 : i32
    return %arg0, %c0_i32 : i32, i32
  }
}

</mosaic_0001>

<llo_original>
// kernel: tpu_custom_call.1
$region0: #{tpu_custom_call.1}
  #allocation0 [shape = 'u32[]', space=smem, size = 0x4, offset = 0x4, fixed_abs, tag = 'smem constant byte address 0x4 - core index']
  #allocation1 [shape = 'u32[72,128]{1,0:T(1,128)}', space=vmem, size = 0x9000, scoped, tag = 'internal scratch']
  %s0 = inlined_call_operand.vmem [shape: f32[72,32], index: 0, kind: input, shape index: {}]
  %s1 = inlined_call_operand.vmem [shape: bf16[32,512], index: 1, kind: input, shape index: {}]
  %s2 = inlined_call_operand.vmem [shape: f32[1,512], index: 2, kind: input, shape index: {}]
  %s3 = inlined_call_operand.hbm [shape: f32[72,512], index: 3, kind: output, shape index: {}]
  %s4 = sld [smem:[#allocation0]]
  $region22: #{tpu_custom_call.1} parent=0
    _
  %s6 = ssub.s32 1, %s4
  %s7 = scalar_select 0, %s6, %s4
  $region1: #{tpu_custom_call.1} parent=0
    #allocation2 [shape = 'u8[147456]{0}', space=vmem, size = 0x24000, scoped, tag = 'output window, operand 0, single buffered']
    #allocation3 [shape = 's32[1]{0}', space=sflag, size = 0x4, scoped, tag = 'scoped memory for tpu_custom_call.1']
    %8 = vsyncpa [#allocation3], 0
    // Predicated region
    $region2: #{tpu_custom_call.1} parent=1 // pred_check
      _
    $region3: #{tpu_custom_call.1} parent=1 // pred_check_branch
      %10 = sbr.rel (0) target = $region5
    $region4: #{tpu_custom_call.1} parent=1 // pred_region
      _
    $region5: #{tpu_custom_call.1} parent=1 // pred_fallthru
      _
    // Predicated region
    $region6: #{tpu_custom_call.1} parent=1 // pred_check
      _
    $region7: #{tpu_custom_call.1} parent=1 // pred_check_branch
      %12 = sbr.rel (0) target = $region9
    $region8: #{tpu_custom_call.1} parent=1 // pred_region
      _
    $region9: #{tpu_custom_call.1} parent=1 // pred_fallthru
      _
    // Predicated region
    $region10: #{tpu_custom_call.1} parent=1 // pred_check
      _
    $region11: #{tpu_custom_call.1} parent=1 // pred_check_branch
      %14 = sbr.rel (0) target = $region13
    $region12: #{tpu_custom_call.1} parent=1 // pred_region
      _
    $region13: #{tpu_custom_call.1} parent=1 // pred_fallthru
      _
    %v16 = vld [vmem:[%s0] sm:$0xff]
    %v17 = vld [vmem:[%s0 + $0x8] sm:$0xff]
    %v18 = vld [vmem:[%s0 + $0x10] sm:$0xff]
    %v19 = vld [vmem:[%s0 + $0x18] sm:$0xff]
    %v20 = vld [vmem:[%s0 + $0x20] sm:$0xff]
    %v21 = vld [vmem:[%s0 + $0x28] sm:$0xff]
    %v22 = vld [vmem:[%s0 + $0x30] sm:$0xff]
    %v23 = vld [vmem:[%s0 + $0x38] sm:$0xff]
    %v24 = vld [vmem:[%s0 + $0x40] sm:$0xff]
    %v25 = vpack.c.bf16 %v17, %v16
    %v26 = vpack.c.bf16 %v19, %v18
    %v27 = vpack.c.bf16 %v21, %v20
    %v28 = vpack.c.bf16 %v23, %v22
    %v29 = vpack.c.bf16 %v24, %v24
    %v30 = vld [vmem:[%s1] sm:$0xff]
    %v31 = vld [vmem:[%s1 + $0x8] sm:$0xff]
    %v32 = vld [vmem:[%s1 + $0x10] sm:$0xff]
    %v33 = vld [vmem:[%s1 + $0x18] sm:$0xff]
    %v34 = vld [vmem:[%s1 + $0x20] sm:$0xff]
    %v35 = vld [vmem:[%s1 + $0x28] sm:$0xff]
    %v36 = vld [vmem:[%s1 + $0x30] sm:$0xff]
    %v37 = vld [vmem:[%s1 + $0x38] sm:$0xff]
    %v38 = vld [vmem:[%s2] sm:$0xf]
    %v40 = vperm.slane %v38, 0
    %v41 = vperm.slane %v38, 1
    %v42 = vperm.slane %v38, 2
    %v43 = vperm.slane %v38, 3
    %v56 = vunpack.c.l.b16 %v30
    %v57 = vunpack.c.h.b16 %v30
    %v58 = vunpack.c.l.b16 %v31
    %v59 = vunpack.c.h.b16 %v31
    %v60 = vunpack.c.l.b16 %v32
    %v61 = vunpack.c.h.b16 %v32
    %v62 = vunpack.c.l.b16 %v33
    %v63 = vunpack.c.h.b16 %v33
    %v64 = vunpack.c.l.b16 %v34
    %v65 = vunpack.c.h.b16 %v34
    %v66 = vunpack.c.l.b16 %v35
    %v67 = vunpack.c.h.b16 %v35
    %v68 = vunpack.c.l.b16 %v36
    %v69 = vunpack.c.h.b16 %v36
    %v70 = vunpack.c.l.b16 %v37
    %v71 = vunpack.c.h.b16 %v37
    %v72 = vpack.c.b16 %v60, %v56
    %v73 = vpack.c.b16 %v61, %v57
    %v74 = vpack.c.b16 %v62, %v58
    %v75 = vpack.c.b16 %v63, %v59
    %v76 = vpack.c.b16 %v68, %v64
    %v77 = vpack.c.b16 %v69, %v65
    %v78 = vpack.c.b16 %v70, %v66
    %v79 = vpack.c.b16 %v71, %v67
    %vm88 = vcmask 261120
    %v90 = vsel %vm88, %v25, 0
    %v93 = vsel %vm88, %v26, 0
    %v96 = vsel %vm88, %v27, 0
    %v99 = vsel %vm88, %v28, 0
    %v102 = vsel %vm88, %v29, 0
    %104 = vmatpush.bf16.msra.mxu0 0
    %105 = vmatpush.bf16.msra.mxu0 0
    %106 = vmatpush.bf16.msra.mxu0 0
    %107 = vmatpush.bf16.msra.mxu0 0
    %108 = vmatpush.bf16.msra.mxu0 0
    %109 = vmatpush.bf16.msra.mxu0 0
    %110 = vmatpush.bf16.msra.mxu0 %v76
    %111 = vmatpush.bf16.msra.mxu0 %v72
    %112 = vmatmul.bf16.gmra.mxu0 %v90
    %v113 = vpop.f32.mrf.mxu0
    %v114 = vadd.f32 %v40, %v113
    %v115 = vpop.f32.mrf.mxu0
    %v116 = vadd.f32 %v40, %v115
    %117 = vmatmul.bf16.gmra.mxu0 %v93
    %v118 = vpop.f32.mrf.mxu0
    %v119 = vadd.f32 %v40, %v118
    %v120 = vpop.f32.mrf.mxu0
    %v121 = vadd.f32 %v40, %v120
    %122 = vmatmul.bf16.gmra.mxu0 %v96
    %v123 = vpop.f32.mrf.mxu0
    %v124 = vadd.f32 %v40, %v123
    %v125 = vpop.f32.mrf.mxu0
    %v126 = vadd.f32 %v40, %v125
    %127 = vmatmul.bf16.gmra.mxu0 %v99
    %v128 = vpop.f32.mrf.mxu0
    %v129 = vadd.f32 %v40, %v128
    %v130 = vpop.f32.mrf.mxu0
    %v131 = vadd.f32 %v40, %v130
    %132 = vmatmul.bf16.gmra.mxu0 %v102
    %v133 = vpop.f32.mrf.mxu0
    %v134 = vadd.f32 %v40, %v133
    %v135 = vpop.f32.mrf.mxu0
    %136 = vdwg.mxu0
    %137 = vmatpush.bf16.msra.mxu0 0
    %138 = vmatpush.bf16.msra.mxu0 0
    %139 = vmatpush.bf16.msra.mxu0 0
    %140 = vmatpush.bf16.msra.mxu0 0
    %141 = vmatpush.bf16.msra.mxu0 0
    %142 = vmatpush.bf16.msra.mxu0 0
    %143 = vmatpush.bf16.msra.mxu0 %v77
    %144 = vmatpush.bf16.msra.mxu0 %v73
    %145 = vmatmul.bf16.gmra.mxu0 %v90
    %v146 = vpop.f32.mrf.mxu0
    %v147 = vadd.f32 %v41, %v146
    %v148 = vpop.f32.mrf.mxu0
    %v149 = vadd.f32 %v41, %v148
    %150 = vmatmul.bf16.gmra.mxu0 %v93
    %v151 = vpop.f32.mrf.mxu0
    %v152 = vadd.f32 %v41, %v151
    %v153 = vpop.f32.mrf.mxu0
    %v154 = vadd.f32 %v41, %v153
    %155 = vmatmul.bf16.gmra.mxu0 %v96
    %v156 = vpop.f32.mrf.mxu0
    %v157 = vadd.f32 %v41, %v156
    %v158 = vpop.f32.mrf.mxu0
    %v159 = vadd.f32 %v41, %v158
    %160 = vmatmul.bf16.gmra.mxu0 %v99
    %v161 = vpop.f32.mrf.mxu0
    %v162 = vadd.f32 %v41, %v161
    %v163 = vpop.f32.mrf.mxu0
    %v164 = vadd.f32 %v41, %v163
    %165 = vmatmul.bf16.gmra.mxu0 %v102
    %v166 = vpop.f32.mrf.mxu0
    %v167 = vadd.f32 %v41, %v166
    %v168 = vpop.f32.mrf.mxu0
    %169 = vdwg.mxu0
    %170 = vmatpush.bf16.msra.mxu0 0
    %171 = vmatpush.bf16.msra.mxu0 0
    %172 = vmatpush.bf16.msra.mxu0 0
    %173 = vmatpush.bf16.msra.mxu0 0
    %174 = vmatpush.bf16.msra.mxu0 0
    %175 = vmatpush.bf16.msra.mxu0 0
    %176 = vmatpush.bf16.msra.mxu0 %v78
    %177 = vmatpush.bf16.msra.mxu0 %v74
    %178 = vmatmul.bf16.gmra.mxu0 %v90
    %v179 = vpop.f32.mrf.mxu0
    %v180 = vadd.f32 %v42, %v179
    %v181 = vpop.f32.mrf.mxu0
    %v182 = vadd.f32 %v42, %v181
    %183 = vmatmul.bf16.gmra.mxu0 %v93
    %v184 = vpop.f32.mrf.mxu0
    %v185 = vadd.f32 %v42, %v184
    %v186 = vpop.f32.mrf.mxu0
    %v187 = vadd.f32 %v42, %v186
    %188 = vmatmul.bf16.gmra.mxu0 %v96
    %v189 = vpop.f32.mrf.mxu0
    %v190 = vadd.f32 %v42, %v189
    %v191 = vpop.f32.mrf.mxu0
    %v192 = vadd.f32 %v42, %v191
    %193 = vmatmul.bf16.gmra.mxu0 %v99
    %v194 = vpop.f32.mrf.mxu0
    %v195 = vadd.f32 %v42, %v194
    %v196 = vpop.f32.mrf.mxu0
    %v197 = vadd.f32 %v42, %v196
    %198 = vmatmul.bf16.gmra.mxu0 %v102
    %v199 = vpop.f32.mrf.mxu0
    %v200 = vadd.f32 %v42, %v199
    %v201 = vpop.f32.mrf.mxu0
    %202 = vdwg.mxu0
    %203 = vmatpush.bf16.msra.mxu0 0
    %204 = vmatpush.bf16.msra.mxu0 0
    %205 = vmatpush.bf16.msra.mxu0 0
    %206 = vmatpush.bf16.msra.mxu0 0
    %207 = vmatpush.bf16.msra.mxu0 0
    %208 = vmatpush.bf16.msra.mxu0 0
    %209 = vmatpush.bf16.msra.mxu0 %v79
    %210 = vmatpush.bf16.msra.mxu0 %v75
    %211 = vmatmul.bf16.gmra.mxu0 %v90
    %v212 = vpop.f32.mrf.mxu0
    %v213 = vadd.f32 %v43, %v212
    %v214 = vpop.f32.mrf.mxu0
    %v215 = vadd.f32 %v43, %v214
    %216 = vmatmul.bf16.gmra.mxu0 %v93
    %v217 = vpop.f32.mrf.mxu0
    %v218 = vadd.f32 %v43, %v217
    %v219 = vpop.f32.mrf.mxu0
    %v220 = vadd.f32 %v43, %v219
    %221 = vmatmul.bf16.gmra.mxu0 %v96
    %v222 = vpop.f32.mrf.mxu0
    %v223 = vadd.f32 %v43, %v222
    %v224 = vpop.f32.mrf.mxu0
    %v225 = vadd.f32 %v43, %v224
    %226 = vmatmul.bf16.gmra.mxu0 %v99
    %v227 = vpop.f32.mrf.mxu0
    %v228 = vadd.f32 %v43, %v227
    %v229 = vpop.f32.mrf.mxu0
    %v230 = vadd.f32 %v43, %v229
    %231 = vmatmul.bf16.gmra.mxu0 %v102
    %v232 = vpop.f32.mrf.mxu0
    %v233 = vadd.f32 %v43, %v232
    %v234 = vpop.f32.mrf.mxu0
    %235 = vdwg.mxu0
    %236 = vst [vmem:[#allocation2] sm:$0xff] %v114
    %237 = vst [vmem:[#allocation2 + $0x8] sm:$0xff] %v147
    %238 = vst [vmem:[#allocation2 + $0x10] sm:$0xff] %v180
    %239 = vst [vmem:[#allocation2 + $0x18] sm:$0xff] %v213
    %240 = vst [vmem:[#allocation2 + $0x20] sm:$0xff] %v116
    %241 = vst [vmem:[#allocation2 + $0x28] sm:$0xff] %v149
    %242 = vst [vmem:[#allocation2 + $0x30] sm:$0xff] %v182
    %243 = vst [vmem:[#allocation2 + $0x38] sm:$0xff] %v215
    %244 = vst [vmem:[#allocation2 + $0x40] sm:$0xff] %v119
    %245 = vst [vmem:[#allocation2 + $0x48] sm:$0xff] %v152
    %246 = vst [vmem:[#allocation2 + $0x50] sm:$0xff] %v185
    %247 = vst [vmem:[#allocation2 + $0x58] sm:$0xff] %v218
    %248 = vst [vmem:[#allocation2 + $0x60] sm:$0xff] %v121
    %249 = vst [vmem:[#allocation2 + $0x68] sm:$0xff] %v154
    %250 = vst [vmem:[#allocation2 + $0x70] sm:$0xff] %v187
    %251 = vst [vmem:[#allocation2 + $0x78] sm:$0xff] %v220
    %252 = vst [vmem:[#allocation2 + $0x80] sm:$0xff] %v124
    %253 = vst [vmem:[#allocation2 + $0x88] sm:$0xff] %v157
    %254 = vst [vmem:[#allocation2 + $0x90] sm:$0xff] %v190
    %255 = vst [vmem:[#allocation2 + $0x98] sm:$0xff] %v223
    %256 = vst [vmem:[#allocation2 + $0xa0] sm:$0xff] %v126
    %257 = vst [vmem:[#allocation2 + $0xa8] sm:$0xff] %v159
    %258 = vst [vmem:[#allocation2 + $0xb0] sm:$0xff] %v192
    %259 = vst [vmem:[#allocation2 + $0xb8] sm:$0xff] %v225
    %260 = vst [vmem:[#allocation2 + $0xc0] sm:$0xff] %v129
    %261 = vst [vmem:[#allocation2 + $0xc8] sm:$0xff] %v162
    %262 = vst [vmem:[#allocation2 + $0xd0] sm:$0xff] %v195
    %263 = vst [vmem:[#allocation2 + $0xd8] sm:$0xff] %v228
    %264 = vst [vmem:[#allocation2 + $0xe0] sm:$0xff] %v131
    %265 = vst [vmem:[#allocation2 + $0xe8] sm:$0xff] %v164
    %266 = vst [vmem:[#allocation2 + $0xf0] sm:$0xff] %v197
    %267 = vst [vmem:[#allocation2 + $0xf8] sm:$0xff] %v230
    %268 = vst [vmem:[#allocation2 + $0x100] sm:$0xff] %v134
    %269 = vst [vmem:[#allocation2 + $0x108] sm:$0xff] %v167
    %270 = vst [vmem:[#allocation2 + $0x110] sm:$0xff] %v200
    %271 = vst [vmem:[#allocation2 + $0x118] sm:$0xff] %v233
    // Predicated region
    $region14: #{tpu_custom_call.1} parent=1 // pred_check
      _
    $region15: #{tpu_custom_call.1} parent=1 // pred_check_branch
      %273 = sbr.rel (0) target = $region17
    $region16: #{tpu_custom_call.1} parent=1 // pred_region
      %275 = vsyncadd [#allocation3], 0
      %s276 = sshll.u32 [#allocation2], 4
      %s277 = int_to_ptr.vmem [resolvable:$true] %s276
      %s278 = sshll.u32 %s3, 4
      %s279 = int_to_ptr.hbm [resolvable:$true] %s278
      %284 = dma.vmem_to_hbm [thread:$0]  %s277, 4608, %s279, [#allocation3], 512, 512, 32
    $region17: #{tpu_custom_call.1} parent=1 // pred_fallthru
      _
    // Predicated region
    $region18: #{tpu_custom_call.1} parent=1 // pred_check
      _
    $region19: #{tpu_custom_call.1} parent=1 // pred_check_branch
      %286 = sbr.rel (0) target = $region21
    $region20: #{tpu_custom_call.1} parent=1 // pred_region
      %288 = dma.done [#allocation3], 4608
    $region21: #{tpu_custom_call.1} parent=1 // pred_fallthru
      _
    %289 = vsyncpa [#allocation3], 1

</llo_original>
